<compile_context>
chip_gen: v6e
topology: v6e:2x2x1
jax: 0.10.0
libtpu: 0.0.40
codegen_flags: <defaults>
</compile_context>

<pallas_src>
import jax
import jax.numpy as jnp
from jax.experimental import pallas as pl
from jax.experimental.pallas import tpu as pltpu

_EPS = 1e-6
_LANES = 128
_MAX_BLOCK_ROWS = 1024  # 1024 x 128 x 4 B = 512 KiB per input tile


def _mse_log_kernel(pred_ref, gt_ref, sum_ref, cnt_ref, acc_sum, acc_cnt):
    i = pl.program_id(1)  # reduction axis (per-core tile index)

    @pl.when(i == 0)
    def _():
        acc_sum[...] = jnp.zeros_like(acc_sum)
        acc_cnt[...] = jnp.zeros_like(acc_cnt)

    pred = jnp.maximum(pred_ref[...].astype(jnp.float32), 0.0)   # clamp(min=0)
    gt = gt_ref[...].astype(jnp.float32)

    # One log (EUP) per element instead of two; divide is full precision and
    # mathematically identical to log(pred+eps) - log(gt+eps).
    err = jnp.log((pred + _EPS) / (gt + _EPS))
    maskf = (gt > 0.0).astype(jnp.float32)

    # Per-lane accumulation (VPU only); the expensive cross-lane reduce runs
    # exactly once, in the final grid step.
    acc_sum[...] += err * err * maskf
    acc_cnt[...] += maskf

    @pl.when(i == pl.num_programs(1) - 1)
    def _():
        sum_ref[...] = jnp.sum(acc_sum[...]).reshape(1, 1, 1)
        cnt_ref[...] = jnp.sum(acc_cnt[...]).reshape(1, 1, 1)


@jax.jit
def mse_log_loss(prediction, gt):
    n = prediction.size

    rows = pl.cdiv(n, _LANES)
    rows8 = pl.cdiv(rows, 8) * 8                             # sublane-align
    num_tiles = pl.cdiv(rows8, _MAX_BLOCK_ROWS)
    block_rows = pl.cdiv(pl.cdiv(rows8, num_tiles), 8) * 8   # multiple of 8
    rows_padded = num_tiles * block_rows
    pad = rows_padded * _LANES - n

    pred_flat = prediction.reshape(-1)
    gt_flat = gt.reshape(-1)
    if pad:
        # Minimal zero pad; gt-pad == 0 is excluded by the mask. Skipped
        # entirely (free reshape, no HBM copy) when n tiles exactly.
        pred_flat = jnp.pad(pred_flat, (0, pad))
        gt_flat = jnp.pad(gt_flat, (0, pad))
    pred2d = pred_flat.reshape(rows_padded, _LANES)
    gt2d = gt_flat.reshape(rows_padded, _LANES)

    # v7x megacore split: one partial reduction per TensorCore when possible.
    num_cores = 2 if num_tiles % 2 == 0 else 1
    tiles_per_core = num_tiles // num_cores

    in_map = lambda c, i: (c * tiles_per_core + i, 0)
    out_map = lambda c, i: (c, 0, 0)

    sum_part, cnt_part = pl.pallas_call(
        _mse_log_kernel,
        out_shape=(
            jax.ShapeDtypeStruct((num_cores, 1, 1), jnp.float32),
            jax.ShapeDtypeStruct((num_cores, 1, 1), jnp.float32),
        ),
        grid_spec=pltpu.PrefetchScalarGridSpec(
            num_scalar_prefetch=0,
            grid=(num_cores, tiles_per_core),
            in_specs=[
                pl.BlockSpec((block_rows, _LANES), in_map),
                pl.BlockSpec((block_rows, _LANES), in_map),
            ],
            out_specs=[
                pl.BlockSpec((1, 1, 1), out_map),
                pl.BlockSpec((1, 1, 1), out_map),
            ],
            scratch_shapes=[
                pltpu.VMEM((block_rows, _LANES), jnp.float32),
                pltpu.VMEM((block_rows, _LANES), jnp.float32),
            ],
        ),
        compiler_params=pltpu.CompilerParams(
            dimension_semantics=("parallel", "arbitrary"),
        ),
    )(pred2d, gt2d)

    # Mean over masked elements (count == 0 -> NaN, matching torch.mean([])).
    return (jnp.sum(sum_part) / jnp.sum(cnt_part)).astype(jnp.float32)


def _reference(prediction, gt):
    pred = jnp.maximum(prediction.astype(jnp.float32), 0.0)
    gtf = gt.astype(jnp.float32)
    err = jnp.log(pred + _EPS) - jnp.log(gtf + _EPS)
    mask = gtf > 0.0
    return jnp.sum(jnp.where(mask, err * err, 0.0)) / jnp.sum(
        mask.astype(jnp.float32)
    )


if __name__ == "__main__":
    key = jax.random.PRNGKey(0)

    # (1) small NCHW case, exact tiling (no pad);
    # (2) non-multiple-of-128 case (exercises the minimal-pad path);
    # (3) multi-tile case (exercises the 2-partial / parallel-core path).
    shapes = [(2, 4, 16, 16), (3, 4, 40, 48), (4, 4, 128, 128)]

    for idx, shape in enumerate(shapes):
        k1, k2 = jax.random.split(jax.random.fold_in(key, idx))
        prediction = jax.random.normal(k1, shape, dtype=jnp.float32) + 1.0
        gt_raw = jax.random.uniform(
            k2, shape, dtype=jnp.float32, minval=-0.5, maxval=2.0
        )
        gt = jnp.where(gt_raw > 0.0, gt_raw, 0.0)  # zeros = invalid pixels

        loss = mse_log_loss(prediction, gt)
        jax.block_until_ready(loss)

        ref = _reference(prediction, gt)
        assert jnp.allclose(loss, ref, rtol=1e-4, atol=1e-5), (shape, loss, ref)

    print("KERNEL_OK")
</pallas_src>

<mosaic_0001>
module attributes {stable_mosaic.version = 11 : i64} {
  func.func @_mse_log_kernel(%arg0: i32, %arg1: i32, %arg2: memref<16x128xf32, #tpu.memory_space<vmem>>, %arg3: memref<16x128xf32, #tpu.memory_space<vmem>>, %arg4: memref<1x1x1xf32, #tpu.memory_space<vmem>>, %arg5: memref<1x1x1xf32, #tpu.memory_space<vmem>>, %arg6: memref<16x128xf32, #tpu.memory_space<vmem>>, %arg7: memref<16x128xf32, #tpu.memory_space<vmem>>) attributes {dimension_semantics = [#tpu.dimension_semantics<parallel>, #tpu.dimension_semantics<arbitrary>], iteration_bounds = array<i64: 1, 1>, scalar_prefetch = 0 : i64, scratch_operands = 2 : i64, tpu.core_type = #tpu.core_type<tc>, window_params = [{transform_indices = @transform_0, window_bounds = array<i64: 16, 128>}, {transform_indices = @transform_1, window_bounds = array<i64: 16, 128>}, {transform_indices = @transform_2, window_bounds = array<i64: 1, 1, 1>}, {transform_indices = @transform_3, window_bounds = array<i64: 1, 1, 1>}]} {
    %c0_i32 = arith.constant 0 : i32
    %0 = arith.cmpi eq, %arg1, %c0_i32 : i32
    %1 = arith.extui %0 : i1 to i32
    %c0_i32_0 = arith.constant 0 : i32
    %2 = arith.cmpi ne, %1, %c0_i32_0 : i32
    scf.if %2 {
      %cst_17 = arith.constant 0.000000e+00 : f32
      %28 = vector.broadcast %cst_17 : f32 to vector<16x128xf32>
      %c0_18 = arith.constant 0 : index
      %c0_19 = arith.constant 0 : index
      %29 = vector.load %arg6[%c0_18, %c0_19] : memref<16x128xf32, #tpu.memory_space<vmem>>, vector<16x128xf32>
      tpu.vector_store %arg6[%c0_18, %c0_19], %28 {strides = array<i32>} : memref<16x128xf32, #tpu.memory_space<vmem>>, vector<16x128xf32>,
      %cst_20 = arith.constant 0.000000e+00 : f32
      %30 = vector.broadcast %cst_20 : f32 to vector<16x128xf32>
      %c0_21 = arith.constant 0 : index
      %c0_22 = arith.constant 0 : index
      %31 = vector.load %arg7[%c0_21, %c0_22] : memref<16x128xf32, #tpu.memory_space<vmem>>, vector<16x128xf32>
      tpu.vector_store %arg7[%c0_21, %c0_22], %30 {strides = array<i32>} : memref<16x128xf32, #tpu.memory_space<vmem>>, vector<16x128xf32>,
    } else {
    }
    %c0 = arith.constant 0 : index
    %c0_1 = arith.constant 0 : index
    %3 = vector.load %arg2[%c0, %c0_1] : memref<16x128xf32, #tpu.memory_space<vmem>>, vector<16x128xf32>
    %cst = arith.constant 0.000000e+00 : f32
    %4 = vector.broadcast %cst : f32 to vector<16x128xf32>
    %5 = arith.maximumf %3, %4 : vector<16x128xf32>
    %c0_2 = arith.constant 0 : index
    %c0_3 = arith.constant 0 : index
    %6 = vector.load %arg3[%c0_2, %c0_3] : memref<16x128xf32, #tpu.memory_space<vmem>>, vector<16x128xf32>
    %cst_4 = arith.constant 9.99999997E-7 : f32
    %7 = vector.broadcast %cst_4 : f32 to vector<16x128xf32>
    %8 = arith.addf %5, %7 : vector<16x128xf32>
    %cst_5 = arith.constant 9.99999997E-7 : f32
    %9 = vector.broadcast %cst_5 : f32 to vector<16x128xf32>
    %10 = arith.addf %6, %9 : vector<16x128xf32>
    %11 = arith.divf %8, %10 : vector<16x128xf32>
    %12 = math.log %11 : vector<16x128xf32>
    %cst_6 = arith.constant 0.000000e+00 : f32
    %13 = vector.broadcast %cst_6 : f32 to vector<16x128xf32>
    %14 = arith.cmpf ogt, %6, %13 : vector<16x128xf32>
    %15 = arith.extui %14 : vector<16x128xi1> to vector<16x128xi32>
    %16 = arith.sitofp %15 : vector<16x128xi32> to vector<16x128xf32>
    %c0_7 = arith.constant 0 : index
    %c0_8 = arith.constant 0 : index
    %17 = vector.load %arg6[%c0_7, %c0_8] : memref<16x128xf32, #tpu.memory_space<vmem>>, vector<16x128xf32>
    %18 = arith.mulf %12, %12 : vector<16x128xf32>
    %19 = arith.mulf %18, %16 : vector<16x128xf32>
    %20 = arith.addf %17, %19 : vector<16x128xf32>
    %c0_9 = arith.constant 0 : index
    %c0_10 = arith.constant 0 : index
    %21 = vector.load %arg6[%c0_9, %c0_10] : memref<16x128xf32, #tpu.memory_space<vmem>>, vector<16x128xf32>
    tpu.vector_store %arg6[%c0_9, %c0_10], %20 {strides = array<i32>} : memref<16x128xf32, #tpu.memory_space<vmem>>, vector<16x128xf32>,
    %c0_11 = arith.constant 0 : index
    %c0_12 = arith.constant 0 : index
    %22 = vector.load %arg7[%c0_11, %c0_12] : memref<16x128xf32, #tpu.memory_space<vmem>>, vector<16x128xf32>
    %23 = arith.addf %22, %16 : vector<16x128xf32>
    %c0_13 = arith.constant 0 : index
    %c0_14 = arith.constant 0 : index
    %24 = vector.load %arg7[%c0_13, %c0_14] : memref<16x128xf32, #tpu.memory_space<vmem>>, vector<16x128xf32>
    tpu.vector_store %arg7[%c0_13, %c0_14], %23 {strides = array<i32>} : memref<16x128xf32, #tpu.memory_space<vmem>>, vector<16x128xf32>,
    %c0_i32_15 = arith.constant 0 : i32
    %25 = arith.cmpi eq, %arg1, %c0_i32_15 : i32
    %26 = arith.extui %25 : i1 to i32
    %c0_i32_16 = arith.constant 0 : i32
    %27 = arith.cmpi ne, %26, %c0_i32_16 : i32
    scf.if %27 {
      %c0_17 = arith.constant 0 : index
      %c0_18 = arith.constant 0 : index
      %28 = vector.load %arg6[%c0_17, %c0_18] : memref<16x128xf32, #tpu.memory_space<vmem>>, vector<16x128xf32>
      %29 = vector.shape_cast %28 : vector<16x128xf32> to vector<1x16x128xf32>
      %cst_19 = arith.constant dense<0.000000e+00> : vector<1xf32>
      %30 = vector.multi_reduction <add>, %29, %cst_19 [1, 2] : vector<1x16x128xf32> to vector<1xf32>
      %31 = vector.shape_cast %30 : vector<1xf32> to vector<1x1x1xf32>
      %32 = vector.extract %31[0, 0, 0] : f32 from vector<1x1x1xf32>
      %33 = vector.broadcast %32 : f32 to vector<1x1x1xf32>
      %c0_20 = arith.constant 0 : index
      %c0_21 = arith.constant 0 : index
      %c0_22 = arith.constant 0 : index
      %34 = vector.load %arg4[%c0_20, %c0_21, %c0_22] : memref<1x1x1xf32, #tpu.memory_space<vmem>>, vector<1x1x1xf32>
      tpu.vector_store %arg4[%c0_20, %c0_21, %c0_22], %33 {strides = array<i32>} : memref<1x1x1xf32, #tpu.memory_space<vmem>>, vector<1x1x1xf32>,
      %c0_23 = arith.constant 0 : index
      %c0_24 = arith.constant 0 : index
      %35 = vector.load %arg7[%c0_23, %c0_24] : memref<16x128xf32, #tpu.memory_space<vmem>>, vector<16x128xf32>
      %36 = vector.shape_cast %35 : vector<16x128xf32> to vector<1x16x128xf32>
      %cst_25 = arith.constant dense<0.000000e+00> : vector<1xf32>
      %37 = vector.multi_reduction <add>, %36, %cst_25 [1, 2] : vector<1x16x128xf32> to vector<1xf32>
      %38 = vector.shape_cast %37 : vector<1xf32> to vector<1x1x1xf32>
      %39 = vector.extract %38[0, 0, 0] : f32 from vector<1x1x1xf32>
      %40 = vector.broadcast %39 : f32 to vector<1x1x1xf32>
      %c0_26 = arith.constant 0 : index
      %c0_27 = arith.constant 0 : index
      %c0_28 = arith.constant 0 : index
      %41 = vector.load %arg5[%c0_26, %c0_27, %c0_28] : memref<1x1x1xf32, #tpu.memory_space<vmem>>, vector<1x1x1xf32>
      tpu.vector_store %arg5[%c0_26, %c0_27, %c0_28], %40 {strides = array<i32>} : memref<1x1x1xf32, #tpu.memory_space<vmem>>, vector<1x1x1xf32>,
    } else {
    }
    return
  }
  func.func @transform_0(%arg0: i32, %arg1: i32) -> (i32, i32) {
    %c1_i32 = arith.constant 1 : i32
    %0 = arith.muli %arg0, %c1_i32 : i32
    %1 = arith.addi %0, %arg1 : i32
    %c0_i32 = arith.constant 0 : i32
    %c0_i32_0 = arith.constant 0 : i32
    return %1, %c0_i32 : i32, i32
  }
  func.func @transform_1(%arg0: i32, %arg1: i32) -> (i32, i32) {
    %c1_i32 = arith.constant 1 : i32
    %0 = arith.muli %arg0, %c1_i32 : i32
    %1 = arith.addi %0, %arg1 : i32
    %c0_i32 = arith.constant 0 : i32
    %c0_i32_0 = arith.constant 0 : i32
    return %1, %c0_i32 : i32, i32
  }
  func.func @transform_2(%arg0: i32, %arg1: i32) -> (i32, i32, i32) {
    %c0_i32 = arith.constant 0 : i32
    %c0_i32_0 = arith.constant 0 : i32
    %c0_i32_1 = arith.constant 0 : i32
    return %arg0, %c0_i32, %c0_i32_0 : i32, i32, i32
  }
  func.func @transform_3(%arg0: i32, %arg1: i32) -> (i32, i32, i32) {
    %c0_i32 = arith.constant 0 : i32
    %c0_i32_0 = arith.constant 0 : i32
    %c0_i32_1 = arith.constant 0 : i32
    return %arg0, %c0_i32, %c0_i32_0 : i32, i32, i32
  }
}

</mosaic_0001>

<llo_original>
// kernel: mse_log_loss.1
$region0: #{mse_log_loss.1}
  #allocation0 [shape = 'u32[]', space=smem, size = 0x4, offset = 0x4, fixed_abs, tag = 'smem constant byte address 0x4 - core index']
  #allocation1 [shape = 'u32[144,128]{1,0:T(1,128)}', space=vmem, size = 0x12000, scoped, tag = 'internal scratch']
  #allocation2 [shape = 'f32[16,128]{1,0:T(8,128)}', space=vmem, size = 0x2000, scoped, tag = 'scratch operand']
  #allocation3 [shape = 'f32[16,128]{1,0:T(8,128)}', space=vmem, size = 0x2000, scoped, tag = 'scratch operand']
  %s0 = inlined_call_operand.vmem [shape: f32[16,128], index: 0, kind: input, shape index: {}]
  %s1 = inlined_call_operand.vmem [shape: f32[16,128], index: 1, kind: input, shape index: {}]
  %s2 = inlined_call_operand.hbm [shape: f32[1,1,1], index: 2, kind: output, shape index: {0}]
  %s3 = inlined_call_operand.hbm [shape: f32[1,1,1], index: 3, kind: output, shape index: {1}]
  %4 = xla_tuple %s2, %s3
  %s5 = sld [smem:[#allocation0]]
  $region34: #{mse_log_loss.1} parent=0
    _
  %s7 = ssub.s32 1, %s5
  %s8 = scalar_select 0, %s7, %s5
  $region1: #{mse_log_loss.1} parent=0
    #allocation4 [shape = 'u8[512]{0}', space=vmem, size = 0x400, scoped, tag = 'output window, operand 0, single buffered']
    #allocation5 [shape = 's32[1]{0}', space=sflag, size = 0x4, scoped, tag = 'scoped memory for mse_log_loss.1']
    #allocation6 [shape = 'u8[512]{0}', space=vmem, size = 0x400, scoped, tag = 'output window, operand 1, single buffered']
    #allocation7 [shape = 's32[1]{0}', space=sflag, size = 0x4, scoped, tag = 'scoped memory for mse_log_loss.1']
    %9 = vsyncpa [#allocation5], 0
    %10 = vsyncpa [#allocation7], 0
    // Predicated region
    $region2: #{mse_log_loss.1} parent=1 // pred_check
      _
    $region3: #{mse_log_loss.1} parent=1 // pred_check_branch
      %12 = sbr.rel (0) target = $region5
    $region4: #{mse_log_loss.1} parent=1 // pred_region
      %s13 = sadd.s32 0, 0
      %s14 = smul.u32 2, %s13
      %p15 = scmp.lt.s32.totalorder %s14, 1
      %s16 = scalar_select %p15, %s14, 1
      %s17 = smul.addr %s16, 8
      %s18 = scalar_lea.vmem %s0, %s17
      %s19 = sadd.s32 0, 0
      %s20 = smul.u32 2, %s19
    $region5: #{mse_log_loss.1} parent=1 // pred_fallthru
      _
    // Predicated region
    $region6: #{mse_log_loss.1} parent=1 // pred_check
      _
    $region7: #{mse_log_loss.1} parent=1 // pred_check_branch
      %22 = sbr.rel (0) target = $region9
    $region8: #{mse_log_loss.1} parent=1 // pred_region
      %s23 = sadd.s32 0, 0
      %s24 = smul.u32 2, %s23
      %p25 = scmp.lt.s32.totalorder %s24, 1
      %s26 = scalar_select %p25, %s24, 1
      %s27 = smul.addr %s26, 8
      %s28 = scalar_lea.vmem %s1, %s27
      %s29 = sadd.s32 0, 0
      %s30 = smul.u32 2, %s29
    $region9: #{mse_log_loss.1} parent=1 // pred_fallthru
      _
    %s31 = sadd.s32 0, 0
    %s32 = smul.u32 2, %s31
    %p33 = scmp.lt.s32.totalorder %s32, 1
    %s34 = scalar_select %p33, %s32, 1
    %s35 = smul.addr %s34, 8
    %s36 = scalar_lea.vmem %s0, %s35
    %s37 = sadd.s32 0, 0
    %s38 = smul.u32 2, %s37
    %p39 = scmp.lt.s32.totalorder %s38, 1
    %s40 = scalar_select %p39, %s38, 1
    %s41 = smul.addr %s40, 8
    %s42 = scalar_lea.vmem %s1, %s41
    %s43 = sadd.s32 0, 0
    %s44 = smul.u32 2, %s43
    %p45 = scmp.lt.s32.totalorder %s44, 1
    %s46 = scalar_select %p45, %s44, 1
    %s47 = smul.addr %s46, 8
    %s48 = scalar_lea.vmem %s0, %s47
    %s49 = sadd.s32 0, 0
    %s50 = smul.u32 2, %s49
    %s51 = sadd.s32 0, 0
    %s52 = smul.u32 2, %s51
    %p53 = scmp.lt.s32.totalorder %s52, 1
    %s54 = scalar_select %p53, %s52, 1
    %s55 = smul.addr %s54, 8
    %s56 = scalar_lea.vmem %s1, %s55
    %s57 = sadd.s32 0, 0
    %s58 = smul.u32 2, %s57
    %p59 = scmp.eq.s32.totalorder 0, 0
    // Predicated region
    $region10: #{mse_log_loss.1} parent=1 // pred_check
      %p60 = pneg %p59
    $region11: #{mse_log_loss.1} parent=1 // pred_check_branch
      %62 = sbr.rel (%p60) target = $region13
    $region12: #{mse_log_loss.1} parent=1 // pred_region
      %63 = vst [vmem:[#allocation2] sm:$0xff] 0.0
      %64 = vst [vmem:[#allocation2 + $0x8] sm:$0xff] 0.0
      %65 = vst [vmem:[#allocation3] sm:$0xff] 0.0
      %66 = vst [vmem:[#allocation3 + $0x8] sm:$0xff] 0.0
    $region13: #{mse_log_loss.1} parent=1 // pred_fallthru
      _
    %v67 = vld [vmem:[%s48] sm:$0xff]
    %v68 = vld [vmem:[%s48 + $0x8] sm:$0xff]
    %v69 = vmax.f32 %v67, 0.0
    %v70 = vmax.f32 %v68, 0.0
    %v71 = vld [vmem:[%s56] sm:$0xff]
    %v72 = vld [vmem:[%s56 + $0x8] sm:$0xff]
    %v73 = vadd.f32 %v69, 1e-06
    %v74 = vadd.f32 %v70, 1e-06
    %v75 = vadd.f32 %v71, 1e-06
    %v76 = vadd.f32 %v72, 1e-06
    %v77 = vrcp.pop %v75
    %v78 = vmul.f32 %v73, %v77
    %v79 = vrcp.pop %v76
    %v80 = vmul.f32 %v74, %v79
    %v81 = vlog2.pop %v78
    %v82 = vmul.f32 %v81, 0.6931472
    %v83 = vlog2.pop %v80
    %v84 = vmul.f32 %v83, 0.6931472
    %vm85 = vcmp.gt.f32.partialorder %v71, 0.0
    %vm86 = vcmp.gt.f32.partialorder %v72, 0.0
    %v87 = vsel %vm85, 1, 0
    %v88 = vsel %vm86, 1, 0
    %v89 = vcvt.s32.f32 %v87
    %v90 = vcvt.s32.f32 %v88
    %v91 = vld [vmem:[#allocation2] sm:$0xff]
    %v92 = vld [vmem:[#allocation2 + $0x8] sm:$0xff]
    %v93 = vmul.f32 %v82, %v82
    %v94 = vmul.f32 %v84, %v84
    %v95 = vmul.f32 %v93, %v89
    %v96 = vmul.f32 %v94, %v90
    %v97 = vadd.f32 %v91, %v95
    %v98 = vadd.f32 %v92, %v96
    %99 = vst [vmem:[#allocation2] sm:$0xff] %v97
    %100 = vst [vmem:[#allocation2 + $0x8] sm:$0xff] %v98
    %v101 = vld [vmem:[#allocation3] sm:$0xff]
    %v102 = vld [vmem:[#allocation3 + $0x8] sm:$0xff]
    %v103 = vadd.f32 %v101, %v89
    %v104 = vadd.f32 %v102, %v90
    %105 = vst [vmem:[#allocation3] sm:$0xff] %v103
    %106 = vst [vmem:[#allocation3 + $0x8] sm:$0xff] %v104
    // Predicated region
    $region14: #{mse_log_loss.1} parent=1 // pred_check
      %p107 = pneg %p59
    $region15: #{mse_log_loss.1} parent=1 // pred_check_branch
      %109 = sbr.rel (%p107) target = $region17
    $region16: #{mse_log_loss.1} parent=1 // pred_region
      %v110 = vld [vmem:[#allocation2] sm:$0xff]
      %v111 = vld [vmem:[#allocation2 + $0x8] sm:$0xff]
      %v112 = vadd.f32 %v110, %v111
      %113 = vadd.xlane.f32.xlu0 %v112
      %v114 = vpop.xlane.xlu0 %113
      %v115 = vrot.slane %v114, 4
      %v116 = vadd.f32 %v114, %v115
      %v117 = vrot.slane %v116, 2
      %v118 = vadd.f32 %v116, %v117
      %v119 = vrot.slane %v118, 1
      %v120 = vadd.f32 %v118, %v119
      %s121 = vtos %v120
      %v122 = vstv %s121
      %vm123 = vcmask 0
      %124 = vst.msk [vmem:[#allocation4] sm:$0x1] %vm123, %v122
      %v125 = vld [vmem:[#allocation3] sm:$0xff]
      %v126 = vld [vmem:[#allocation3 + $0x8] sm:$0xff]
      %v127 = vadd.f32 %v125, %v126
      %128 = vadd.xlane.f32.xlu0 %v127
      %v129 = vpop.xlane.xlu0 %128
      %v130 = vrot.slane %v129, 4
      %v131 = vadd.f32 %v129, %v130
      %v132 = vrot.slane %v131, 2
      %v133 = vadd.f32 %v131, %v132
      %v134 = vrot.slane %v133, 1
      %v135 = vadd.f32 %v133, %v134
      %s136 = vtos %v135
      %v137 = vstv %s136
      %138 = vst.msk [vmem:[#allocation6] sm:$0x1] %vm123, %v137
    $region17: #{mse_log_loss.1} parent=1 // pred_fallthru
      _
    // Predicated region
    $region18: #{mse_log_loss.1} parent=1 // pred_check
      _
    $region19: #{mse_log_loss.1} parent=1 // pred_check_branch
      %140 = sbr.rel (0) target = $region21
    $region20: #{mse_log_loss.1} parent=1 // pred_region
      %s142 = ssub.s32 16, 16
      %143 = vsyncadd [#allocation5], %s142
      %s145 = sshll.u32 [#allocation4], 4
      %s146 = int_to_ptr.vmem [resolvable:$true] %s145
      %148 = dma.vmem_to_hbm [thread:$0]  %s146, 16, %s2, [#allocation5]
    $region21: #{mse_log_loss.1} parent=1 // pred_fallthru
      _
    // Predicated region
    $region22: #{mse_log_loss.1} parent=1 // pred_check
      _
    $region23: #{mse_log_loss.1} parent=1 // pred_check_branch
      %150 = sbr.rel (0) target = $region25
    $region24: #{mse_log_loss.1} parent=1 // pred_region
      %s152 = ssub.s32 16, 16
      %153 = vsyncadd [#allocation7], %s152
      %s155 = sshll.u32 [#allocation6], 4
      %s156 = int_to_ptr.vmem [resolvable:$true] %s155
      %158 = dma.vmem_to_hbm [thread:$0]  %s156, 16, %s3, [#allocation7]
    $region25: #{mse_log_loss.1} parent=1 // pred_fallthru
      _
    // Predicated region
    $region26: #{mse_log_loss.1} parent=1 // pred_check
      _
    $region27: #{mse_log_loss.1} parent=1 // pred_check_branch
      %160 = sbr.rel (0) target = $region29
    $region28: #{mse_log_loss.1} parent=1 // pred_region
      %161 = dma.done [#allocation5], 16
    $region29: #{mse_log_loss.1} parent=1 // pred_fallthru
      _
    // Predicated region
    $region30: #{mse_log_loss.1} parent=1 // pred_check
      _
    $region31: #{mse_log_loss.1} parent=1 // pred_check_branch
      %163 = sbr.rel (0) target = $region33
    $region32: #{mse_log_loss.1} parent=1 // pred_region
      %164 = dma.done [#allocation7], 16
    $region33: #{mse_log_loss.1} parent=1 // pred_fallthru
      _
    %165 = vsyncpa [#allocation5], 1
    %166 = vsyncpa [#allocation7], 1

</llo_original>
